<compile_context>
chip_gen: v5e
topology: v5e:2x2
jax: 0.10.0
libtpu: 0.0.40
codegen_flags: <defaults>
</compile_context>

<pallas_src>
import itertools
import numpy as np
import jax
import jax.numpy as jnp
from jax import lax
from jax.experimental import pallas as pl
from jax.experimental.pallas import tpu as pltpu

LANES = 128


def build_order_mat(d, order):
    """All multi-indices of total degree <= order -> int array [K, d], graded-lex."""
    rows = [m for m in itertools.product(range(order + 1), repeat=d)
            if sum(m) <= order]
    rows.sort(key=lambda m: (sum(m), m))
    return np.asarray(rows, dtype=np.int32)


def _build_groups(order_mat, d):
    """Group multi-indices by their first d-1 components (Horner in last feature).

    Returns a graded-lex-sorted list of (prefix_tuple, [(last_order, k), ...]).
    """
    groups = {}
    for k, row in enumerate(np.asarray(order_mat)):
        row = tuple(int(v) for v in row)
        pre = row[:max(d - 1, 0)]
        groups.setdefault(pre, []).append((row[-1], k))
    keys = sorted(groups.keys(), key=lambda m: (sum(m), m))
    return [(pre, sorted(groups[pre])) for pre in keys]


def make_pce_loss_fn(order_mat, order, n_total, d,
                     rows_per_block=1024, chunk_rows=8):
    """Returns jitted (x, y, c, mu) -> scalar loss built around one Pallas kernel."""
    assert order >= 1
    order_mat = np.asarray(order_mat)
    K = order_mat.shape[0]
    groups = _build_groups(order_mat, d)
    n_groups = len(groups)

    # Sample axis -> (rows, 128) sublane/lane packing; block = rows_per_block rows.
    n_rows = -(-n_total // LANES)
    n_rows_rounded = ((n_rows + chunk_rows - 1) // chunk_rows) * chunk_rows
    rpb = min(rows_per_block, n_rows_rounded)
    rpb = ((rpb + chunk_rows - 1) // chunk_rows) * chunk_rows
    rows_per_block = max(chunk_rows, rpb)
    num_blocks = -(-n_rows // rows_per_block)
    n_rows_pad = num_blocks * rows_per_block
    n_pad = n_rows_pad * LANES
    n_chunks = rows_per_block // chunk_rows
    need_mask = (n_pad != n_total)

    def kernel(x_ref, y_ref, c_ref, mu_ref, out_ref):
        i = pl.program_id(0)
        # Hoist all SMEM scalar reads out of the chunk loop.
        cs = [c_ref[k] for k in range(K)]
        mus = [mu_ref[j] for j in range(d)]
        n_acc = min(4, n_groups)

        def chunk_err(ci, masked):
            start = ci * chunk_rows
            if not isinstance(start, int):
                start = pl.multiple_of(start, chunk_rows)
            yc = y_ref[0, pl.ds(start, chunk_rows), :]                    # (8, 128)

            # Per-feature probabilists' Hermite rows He_1..He_order, (8, 128) each.
            herm = []
            for j in range(d):
                zj = x_ref[j, pl.ds(start, chunk_rows), :] - mus[j]
                hj = [None, zj]                                           # He_0 implicit
                if order >= 2:
                    hj.append(zj * zj - 1.0)
                for n in range(3, order + 1):
                    hj.append(zj * hj[n - 1] - float(n - 1) * hj[n - 2])
                herm.append(hj)

            # Grouped, prefix-factored c-weighted sum with round-robin accumulators.
            accs = [None] * n_acc
            prefix_stack = [None] * max(d - 1, 1)
            prev_pre = None
            for gi, (pre, terms) in enumerate(groups):
                sj = 0
                if prev_pre is not None:
                    while sj < d - 1 and pre[sj] == prev_pre[sj]:
                        sj += 1
                for j in range(sj, d - 1):
                    left = prefix_stack[j - 1] if j > 0 else None
                    o = pre[j]
                    if o == 0:
                        prefix_stack[j] = left
                    else:
                        h = herm[j][o]
                        prefix_stack[j] = h if left is None else left * h
                prev_pre = pre
                prefix = prefix_stack[d - 2] if d >= 2 else None

                # Inner c-weighted polynomial in the last feature.
                inner_arr = None
                inner_const = None
                for (o_last, k) in terms:
                    ck = cs[k]
                    if o_last == 0:
                        inner_const = ck if inner_const is None else inner_const + ck
                    else:
                        t = ck * herm[d - 1][o_last]
                        inner_arr = t if inner_arr is None else inner_arr + t
                if inner_arr is None:
                    contrib = inner_const if prefix is None else inner_const * prefix
                else:
                    if inner_const is not None:
                        inner_arr = inner_arr + inner_const
                    contrib = inner_arr if prefix is None else prefix * inner_arr

                a = gi % n_acc
                accs[a] = contrib if accs[a] is None else accs[a] + contrib

            y_pred = accs[0]
            for a in accs[1:]:
                if a is not None:
                    y_pred = y_pred + a

            err = jnp.abs(y_pred - yc)
            if masked:  # only traced for the path that can see padded columns
                row = i * rows_per_block + start
                gidx = ((row + lax.broadcasted_iota(jnp.int32, (chunk_rows, LANES), 0))
                        * LANES
                        + lax.broadcasted_iota(jnp.int32, (chunk_rows, LANES), 1))
                err = jnp.where(gidx < n_total, err, 0.0)
            return err

        def block_sum(masked):
            init = jnp.zeros((chunk_rows, LANES), jnp.float32)
            body = lambda ci, acc: acc + chunk_err(ci, masked)
            if n_chunks <= 8:
                acc = init
                for ci in range(n_chunks):
                    acc = body(ci, acc)
            elif n_chunks % 4 == 0:
                acc = lax.fori_loop(0, n_chunks, body, init, unroll=4)
            else:
                acc = lax.fori_loop(0, n_chunks, body, init)
            # Single cross-lane reduce per block (XLU), scalar partial per block.
            return jnp.sum(acc).reshape(1, 1, 1)

        if need_mask and num_blocks > 1:
            is_last = i == num_blocks - 1

            @pl.when(is_last)
            def _():
                out_ref[...] = block_sum(True)

            @pl.when(jnp.logical_not(is_last))
            def _():
                out_ref[...] = block_sum(False)
        else:
            out_ref[...] = block_sum(need_mask)

    call = pl.pallas_call(
        kernel,
        out_shape=jax.ShapeDtypeStruct((num_blocks, 1, 1), jnp.float32),
        grid_spec=pltpu.PrefetchScalarGridSpec(
            num_scalar_prefetch=0,
            grid=(num_blocks,),
            in_specs=[
                pl.BlockSpec((d, rows_per_block, LANES), lambda i: (0, i, 0)),   # x (d, rows, 128)
                pl.BlockSpec((1, rows_per_block, LANES), lambda i: (0, i, 0)),   # y (1, rows, 128)
                pl.BlockSpec(memory_space=pltpu.MemorySpace.SMEM),               # c  (K,) in SMEM
                pl.BlockSpec(memory_space=pltpu.MemorySpace.SMEM),               # mu (d,) in SMEM
            ],
            out_specs=pl.BlockSpec((1, 1, 1), lambda i: (i, 0, 0)),              # per-block partial
        ),
        compiler_params=pltpu.CompilerParams(
            dimension_semantics=("parallel",),            # megacore-shardable on v7x
            vmem_limit_bytes=32 * 1024 * 1024,            # explicit; safe on v5e/v6e/v7x
        ),
    )

    def loss_fn(x, y, c, mu):
        x = jnp.asarray(x, jnp.float32)
        y = jnp.asarray(y, jnp.float32)
        c = jnp.asarray(c, jnp.float32).reshape(K)
        mu = jnp.asarray(mu, jnp.float32).reshape(d)
        # One fused pad+reshape+transpose to the lane-dense, sublane-packed
        # feature-major layout (d, rows, 128) the kernel consumes.
        x_p = jnp.pad(x, ((0, n_pad - n_total), (0, 0)))
        x_t = jnp.transpose(x_p.reshape(n_rows_pad, LANES, d), (2, 0, 1))
        y_t = jnp.pad(jnp.reshape(y, (n_total,)),
                      (0, n_pad - n_total)).reshape(1, n_rows_pad, LANES)
        partials = call(x_t, y_t, c, mu)
        return jnp.sum(partials) / jnp.float32(n_total)

    return jax.jit(loss_fn)


def pce_loss_reference(x, y, c, mu, order_mat, order):
    """Pure-JAX reference for validation."""
    z = x - mu.reshape(1, -1)
    H = [jnp.ones_like(z), z]
    for n in range(2, order + 1):
        H.append(z * H[n - 1] - float(n - 1) * H[n - 2])
    Hs = jnp.stack(H, axis=0)                                 # (order+1, N, d)
    N, d = x.shape
    cols = []
    for k in range(order_mat.shape[0]):
        b = jnp.ones((N,), jnp.float32)
        for j in range(d):
            b = b * Hs[int(order_mat[k, j]), :, j]
        cols.append(b)
    Phi = jnp.stack(cols, axis=1)                             # (N, K)
    y_pred = Phi @ c                                          # (N,)
    return jnp.mean(jnp.abs(y_pred[:, None] - y))


if __name__ == "__main__":
    d, order = 4, 3
    order_mat = build_order_mat(d, order)                     # (35, 4)
    K = order_mat.shape[0]

    # Configs covering: single padded block, ragged tail, in-kernel fori_loop path
    # (no padding), and a multi-block parallel grid with a masked last block.
    configs = [
        (512, dict()),
        (1000, dict()),
        (16384, dict()),                       # 16 chunks/block -> fori_loop path
        (12800, dict(rows_per_block=32)),      # 4 blocks, masked last block
    ]
    for N, kw in configs:
        key = jax.random.PRNGKey(0)
        kx, ky, kc, km = jax.random.split(key, 4)
        x = jax.random.normal(kx, (N, d), dtype=jnp.float32)
        y = jax.random.normal(ky, (N, 1), dtype=jnp.float32)
        c = jax.random.normal(kc, (K,), dtype=jnp.float32) * 0.1
        mu = jax.random.normal(km, (d,), dtype=jnp.float32) * 0.1

        loss_fn = make_pce_loss_fn(order_mat, order, N, d, **kw)
        loss = jax.block_until_ready(loss_fn(x, y, c, mu))

        ref = jax.block_until_ready(
            pce_loss_reference(x, y, c, mu, order_mat, order))
        assert np.allclose(np.asarray(loss), np.asarray(ref),
                           rtol=1e-4, atol=1e-5), (N, loss, ref)

    print("KERNEL_OK")
</pallas_src>

<mosaic_0001>
module attributes {stable_mosaic.version = 11 : i64} {
  func.func @kernel(%arg0: i32, %arg1: memref<4x8x128xf32, #tpu.memory_space<vmem>>, %arg2: memref<1x8x128xf32, #tpu.memory_space<vmem>>, %arg3: memref<35xf32, #tpu.memory_space<smem>>, %arg4: memref<4xf32, #tpu.memory_space<smem>>, %arg5: memref<1x1x1xf32, #tpu.memory_space<vmem>>) attributes {dimension_semantics = [#tpu.dimension_semantics<parallel>], iteration_bounds = array<i64: 1>, scalar_prefetch = 0 : i64, scratch_operands = 0 : i64, tpu.core_type = #tpu.core_type<tc>, window_params = [{transform_indices = @transform_0, window_bounds = array<i64: 4, 8, 128>}, {transform_indices = @transform_1, window_bounds = array<i64: 1, 8, 128>}, {transform_indices = @transform_2, window_bounds = array<i64: 35>}, {transform_indices = @transform_3, window_bounds = array<i64: 4>}, {transform_indices = @transform_4, window_bounds = array<i64: 1, 1, 1>}]} {
    %c0 = arith.constant 0 : index
    %0 = memref.load %arg3[%c0] : memref<35xf32, #tpu.memory_space<smem>>
    %c1 = arith.constant 1 : index
    %1 = memref.load %arg3[%c1] : memref<35xf32, #tpu.memory_space<smem>>
    %c2 = arith.constant 2 : index
    %2 = memref.load %arg3[%c2] : memref<35xf32, #tpu.memory_space<smem>>
    %c3 = arith.constant 3 : index
    %3 = memref.load %arg3[%c3] : memref<35xf32, #tpu.memory_space<smem>>
    %c4 = arith.constant 4 : index
    %4 = memref.load %arg3[%c4] : memref<35xf32, #tpu.memory_space<smem>>
    %c5 = arith.constant 5 : index
    %5 = memref.load %arg3[%c5] : memref<35xf32, #tpu.memory_space<smem>>
    %c6 = arith.constant 6 : index
    %6 = memref.load %arg3[%c6] : memref<35xf32, #tpu.memory_space<smem>>
    %c7 = arith.constant 7 : index
    %7 = memref.load %arg3[%c7] : memref<35xf32, #tpu.memory_space<smem>>
    %c8 = arith.constant 8 : index
    %8 = memref.load %arg3[%c8] : memref<35xf32, #tpu.memory_space<smem>>
    %c9 = arith.constant 9 : index
    %9 = memref.load %arg3[%c9] : memref<35xf32, #tpu.memory_space<smem>>
    %c10 = arith.constant 10 : index
    %10 = memref.load %arg3[%c10] : memref<35xf32, #tpu.memory_space<smem>>
    %c11 = arith.constant 11 : index
    %11 = memref.load %arg3[%c11] : memref<35xf32, #tpu.memory_space<smem>>
    %c12 = arith.constant 12 : index
    %12 = memref.load %arg3[%c12] : memref<35xf32, #tpu.memory_space<smem>>
    %c13 = arith.constant 13 : index
    %13 = memref.load %arg3[%c13] : memref<35xf32, #tpu.memory_space<smem>>
    %c14 = arith.constant 14 : index
    %14 = memref.load %arg3[%c14] : memref<35xf32, #tpu.memory_space<smem>>
    %c15 = arith.constant 15 : index
    %15 = memref.load %arg3[%c15] : memref<35xf32, #tpu.memory_space<smem>>
    %c16 = arith.constant 16 : index
    %16 = memref.load %arg3[%c16] : memref<35xf32, #tpu.memory_space<smem>>
    %c17 = arith.constant 17 : index
    %17 = memref.load %arg3[%c17] : memref<35xf32, #tpu.memory_space<smem>>
    %c18 = arith.constant 18 : index
    %18 = memref.load %arg3[%c18] : memref<35xf32, #tpu.memory_space<smem>>
    %c19 = arith.constant 19 : index
    %19 = memref.load %arg3[%c19] : memref<35xf32, #tpu.memory_space<smem>>
    %c20 = arith.constant 20 : index
    %20 = memref.load %arg3[%c20] : memref<35xf32, #tpu.memory_space<smem>>
    %c21 = arith.constant 21 : index
    %21 = memref.load %arg3[%c21] : memref<35xf32, #tpu.memory_space<smem>>
    %c22 = arith.constant 22 : index
    %22 = memref.load %arg3[%c22] : memref<35xf32, #tpu.memory_space<smem>>
    %c23 = arith.constant 23 : index
    %23 = memref.load %arg3[%c23] : memref<35xf32, #tpu.memory_space<smem>>
    %c24 = arith.constant 24 : index
    %24 = memref.load %arg3[%c24] : memref<35xf32, #tpu.memory_space<smem>>
    %c25 = arith.constant 25 : index
    %25 = memref.load %arg3[%c25] : memref<35xf32, #tpu.memory_space<smem>>
    %c26 = arith.constant 26 : index
    %26 = memref.load %arg3[%c26] : memref<35xf32, #tpu.memory_space<smem>>
    %c27 = arith.constant 27 : index
    %27 = memref.load %arg3[%c27] : memref<35xf32, #tpu.memory_space<smem>>
    %c28 = arith.constant 28 : index
    %28 = memref.load %arg3[%c28] : memref<35xf32, #tpu.memory_space<smem>>
    %c29 = arith.constant 29 : index
    %29 = memref.load %arg3[%c29] : memref<35xf32, #tpu.memory_space<smem>>
    %c30 = arith.constant 30 : index
    %30 = memref.load %arg3[%c30] : memref<35xf32, #tpu.memory_space<smem>>
    %c31 = arith.constant 31 : index
    %31 = memref.load %arg3[%c31] : memref<35xf32, #tpu.memory_space<smem>>
    %c32 = arith.constant 32 : index
    %32 = memref.load %arg3[%c32] : memref<35xf32, #tpu.memory_space<smem>>
    %c33 = arith.constant 33 : index
    %33 = memref.load %arg3[%c33] : memref<35xf32, #tpu.memory_space<smem>>
    %c34 = arith.constant 34 : index
    %34 = memref.load %arg3[%c34] : memref<35xf32, #tpu.memory_space<smem>>
    %c0_0 = arith.constant 0 : index
    %35 = memref.load %arg4[%c0_0] : memref<4xf32, #tpu.memory_space<smem>>
    %c1_1 = arith.constant 1 : index
    %36 = memref.load %arg4[%c1_1] : memref<4xf32, #tpu.memory_space<smem>>
    %c2_2 = arith.constant 2 : index
    %37 = memref.load %arg4[%c2_2] : memref<4xf32, #tpu.memory_space<smem>>
    %c3_3 = arith.constant 3 : index
    %38 = memref.load %arg4[%c3_3] : memref<4xf32, #tpu.memory_space<smem>>
    %cst = arith.constant 0.000000e+00 : f32
    %39 = vector.broadcast %cst : f32 to vector<8x128xf32>
    %c0_4 = arith.constant 0 : index
    %c0_5 = arith.constant 0 : index
    %c0_6 = arith.constant 0 : index
    %40 = vector.load %arg2[%c0_4, %c0_5, %c0_6] : memref<1x8x128xf32, #tpu.memory_space<vmem>>, vector<1x8x128xf32>
    %41 = vector.shape_cast %40 : vector<1x8x128xf32> to vector<8x128xf32>
    %c0_7 = arith.constant 0 : index
    %c0_8 = arith.constant 0 : index
    %c0_9 = arith.constant 0 : index
    %42 = vector.load %arg1[%c0_7, %c0_8, %c0_9] : memref<4x8x128xf32, #tpu.memory_space<vmem>>, vector<1x8x128xf32>
    %43 = vector.shape_cast %42 : vector<1x8x128xf32> to vector<8x128xf32>
    %44 = vector.broadcast %35 : f32 to vector<8x128xf32>
    %45 = arith.subf %43, %44 : vector<8x128xf32>
    %46 = arith.mulf %45, %45 : vector<8x128xf32>
    %cst_10 = arith.constant 1.000000e+00 : f32
    %47 = vector.broadcast %cst_10 : f32 to vector<8x128xf32>
    %48 = arith.subf %46, %47 : vector<8x128xf32>
    %49 = arith.mulf %45, %48 : vector<8x128xf32>
    %cst_11 = arith.constant 2.000000e+00 : f32
    %50 = vector.broadcast %cst_11 : f32 to vector<8x128xf32>
    %51 = arith.mulf %50, %45 : vector<8x128xf32>
    %52 = arith.subf %49, %51 : vector<8x128xf32>
    %c1_12 = arith.constant 1 : index
    %c0_13 = arith.constant 0 : index
    %c0_14 = arith.constant 0 : index
    %53 = vector.load %arg1[%c1_12, %c0_13, %c0_14] : memref<4x8x128xf32, #tpu.memory_space<vmem>>, vector<1x8x128xf32>
    %54 = vector.shape_cast %53 : vector<1x8x128xf32> to vector<8x128xf32>
    %55 = vector.broadcast %36 : f32 to vector<8x128xf32>
    %56 = arith.subf %54, %55 : vector<8x128xf32>
    %57 = arith.mulf %56, %56 : vector<8x128xf32>
    %cst_15 = arith.constant 1.000000e+00 : f32
    %58 = vector.broadcast %cst_15 : f32 to vector<8x128xf32>
    %59 = arith.subf %57, %58 : vector<8x128xf32>
    %60 = arith.mulf %56, %59 : vector<8x128xf32>
    %cst_16 = arith.constant 2.000000e+00 : f32
    %61 = vector.broadcast %cst_16 : f32 to vector<8x128xf32>
    %62 = arith.mulf %61, %56 : vector<8x128xf32>
    %63 = arith.subf %60, %62 : vector<8x128xf32>
    %c2_17 = arith.constant 2 : index
    %c0_18 = arith.constant 0 : index
    %c0_19 = arith.constant 0 : index
    %64 = vector.load %arg1[%c2_17, %c0_18, %c0_19] : memref<4x8x128xf32, #tpu.memory_space<vmem>>, vector<1x8x128xf32>
    %65 = vector.shape_cast %64 : vector<1x8x128xf32> to vector<8x128xf32>
    %66 = vector.broadcast %37 : f32 to vector<8x128xf32>
    %67 = arith.subf %65, %66 : vector<8x128xf32>
    %68 = arith.mulf %67, %67 : vector<8x128xf32>
    %cst_20 = arith.constant 1.000000e+00 : f32
    %69 = vector.broadcast %cst_20 : f32 to vector<8x128xf32>
    %70 = arith.subf %68, %69 : vector<8x128xf32>
    %71 = arith.mulf %67, %70 : vector<8x128xf32>
    %cst_21 = arith.constant 2.000000e+00 : f32
    %72 = vector.broadcast %cst_21 : f32 to vector<8x128xf32>
    %73 = arith.mulf %72, %67 : vector<8x128xf32>
    %74 = arith.subf %71, %73 : vector<8x128xf32>
    %c3_22 = arith.constant 3 : index
    %c0_23 = arith.constant 0 : index
    %c0_24 = arith.constant 0 : index
    %75 = vector.load %arg1[%c3_22, %c0_23, %c0_24] : memref<4x8x128xf32, #tpu.memory_space<vmem>>, vector<1x8x128xf32>
    %76 = vector.shape_cast %75 : vector<1x8x128xf32> to vector<8x128xf32>
    %77 = vector.broadcast %38 : f32 to vector<8x128xf32>
    %78 = arith.subf %76, %77 : vector<8x128xf32>
    %79 = arith.mulf %78, %78 : vector<8x128xf32>
    %cst_25 = arith.constant 1.000000e+00 : f32
    %80 = vector.broadcast %cst_25 : f32 to vector<8x128xf32>
    %81 = arith.subf %79, %80 : vector<8x128xf32>
    %82 = arith.mulf %78, %81 : vector<8x128xf32>
    %cst_26 = arith.constant 2.000000e+00 : f32
    %83 = vector.broadcast %cst_26 : f32 to vector<8x128xf32>
    %84 = arith.mulf %83, %78 : vector<8x128xf32>
    %85 = arith.subf %82, %84 : vector<8x128xf32>
    %86 = vector.broadcast %1 : f32 to vector<8x128xf32>
    %87 = arith.mulf %86, %78 : vector<8x128xf32>
    %88 = vector.broadcast %5 : f32 to vector<8x128xf32>
    %89 = arith.mulf %88, %81 : vector<8x128xf32>
    %90 = arith.addf %87, %89 : vector<8x128xf32>
    %91 = vector.broadcast %15 : f32 to vector<8x128xf32>
    %92 = arith.mulf %91, %85 : vector<8x128xf32>
    %93 = arith.addf %90, %92 : vector<8x128xf32>
    %94 = vector.broadcast %0 : f32 to vector<8x128xf32>
    %95 = arith.addf %93, %94 : vector<8x128xf32>
    %96 = vector.broadcast %6 : f32 to vector<8x128xf32>
    %97 = arith.mulf %96, %78 : vector<8x128xf32>
    %98 = vector.broadcast %16 : f32 to vector<8x128xf32>
    %99 = arith.mulf %98, %81 : vector<8x128xf32>
    %100 = arith.addf %97, %99 : vector<8x128xf32>
    %101 = vector.broadcast %2 : f32 to vector<8x128xf32>
    %102 = arith.addf %100, %101 : vector<8x128xf32>
    %103 = arith.mulf %67, %102 : vector<8x128xf32>
    %104 = vector.broadcast %8 : f32 to vector<8x128xf32>
    %105 = arith.mulf %104, %78 : vector<8x128xf32>
    %106 = vector.broadcast %19 : f32 to vector<8x128xf32>
    %107 = arith.mulf %106, %81 : vector<8x128xf32>
    %108 = arith.addf %105, %107 : vector<8x128xf32>
    %109 = vector.broadcast %3 : f32 to vector<8x128xf32>
    %110 = arith.addf %108, %109 : vector<8x128xf32>
    %111 = arith.mulf %56, %110 : vector<8x128xf32>
    %112 = vector.broadcast %11 : f32 to vector<8x128xf32>
    %113 = arith.mulf %112, %78 : vector<8x128xf32>
    %114 = vector.broadcast %25 : f32 to vector<8x128xf32>
    %115 = arith.mulf %114, %81 : vector<8x128xf32>
    %116 = arith.addf %113, %115 : vector<8x128xf32>
    %117 = vector.broadcast %4 : f32 to vector<8x128xf32>
    %118 = arith.addf %116, %117 : vector<8x128xf32>
    %119 = arith.mulf %45, %118 : vector<8x128xf32>
    %120 = vector.broadcast %17 : f32 to vector<8x128xf32>
    %121 = arith.mulf %120, %78 : vector<8x128xf32>
    %122 = vector.broadcast %7 : f32 to vector<8x128xf32>
    %123 = arith.addf %121, %122 : vector<8x128xf32>
    %124 = arith.mulf %70, %123 : vector<8x128xf32>
    %125 = arith.addf %95, %124 : vector<8x128xf32>
    %126 = arith.mulf %56, %67 : vector<8x128xf32>
    %127 = vector.broadcast %20 : f32 to vector<8x128xf32>
    %128 = arith.mulf %127, %78 : vector<8x128xf32>
    %129 = vector.broadcast %9 : f32 to vector<8x128xf32>
    %130 = arith.addf %128, %129 : vector<8x128xf32>
    %131 = arith.mulf %126, %130 : vector<8x128xf32>
    %132 = arith.addf %103, %131 : vector<8x128xf32>
    %133 = vector.broadcast %22 : f32 to vector<8x128xf32>
    %134 = arith.mulf %133, %78 : vector<8x128xf32>
    %135 = vector.broadcast %10 : f32 to vector<8x128xf32>
    %136 = arith.addf %134, %135 : vector<8x128xf32>
    %137 = arith.mulf %59, %136 : vector<8x128xf32>
    %138 = arith.addf %111, %137 : vector<8x128xf32>
    %139 = arith.mulf %45, %67 : vector<8x128xf32>
    %140 = vector.broadcast %26 : f32 to vector<8x128xf32>
    %141 = arith.mulf %140, %78 : vector<8x128xf32>
    %142 = vector.broadcast %12 : f32 to vector<8x128xf32>
    %143 = arith.addf %141, %142 : vector<8x128xf32>
    %144 = arith.mulf %139, %143 : vector<8x128xf32>
    %145 = arith.addf %119, %144 : vector<8x128xf32>
    %146 = arith.mulf %45, %56 : vector<8x128xf32>
    %147 = vector.broadcast %28 : f32 to vector<8x128xf32>
    %148 = arith.mulf %147, %78 : vector<8x128xf32>
    %149 = vector.broadcast %13 : f32 to vector<8x128xf32>
    %150 = arith.addf %148, %149 : vector<8x128xf32>
    %151 = arith.mulf %146, %150 : vector<8x128xf32>
    %152 = arith.addf %125, %151 : vector<8x128xf32>
    %153 = vector.broadcast %31 : f32 to vector<8x128xf32>
    %154 = arith.mulf %153, %78 : vector<8x128xf32>
    %155 = vector.broadcast %14 : f32 to vector<8x128xf32>
    %156 = arith.addf %154, %155 : vector<8x128xf32>
    %157 = arith.mulf %48, %156 : vector<8x128xf32>
    %158 = arith.addf %132, %157 : vector<8x128xf32>
    %159 = vector.broadcast %18 : f32 to vector<8x128xf32>
    %160 = arith.mulf %159, %74 : vector<8x128xf32>
    %161 = arith.addf %138, %160 : vector<8x128xf32>
    %162 = arith.mulf %56, %70 : vector<8x128xf32>
    %163 = vector.broadcast %21 : f32 to vector<8x128xf32>
    %164 = arith.mulf %163, %162 : vector<8x128xf32>
    %165 = arith.addf %145, %164 : vector<8x128xf32>
    %166 = arith.mulf %59, %67 : vector<8x128xf32>
    %167 = vector.broadcast %23 : f32 to vector<8x128xf32>
    %168 = arith.mulf %167, %166 : vector<8x128xf32>
    %169 = arith.addf %152, %168 : vector<8x128xf32>
    %170 = vector.broadcast %24 : f32 to vector<8x128xf32>
    %171 = arith.mulf %170, %63 : vector<8x128xf32>
    %172 = arith.addf %158, %171 : vector<8x128xf32>
    %173 = arith.mulf %45, %70 : vector<8x128xf32>
    %174 = vector.broadcast %27 : f32 to vector<8x128xf32>
    %175 = arith.mulf %174, %173 : vector<8x128xf32>
    %176 = arith.addf %161, %175 : vector<8x128xf32>
    %177 = arith.mulf %45, %56 : vector<8x128xf32>
    %178 = arith.mulf %177, %67 : vector<8x128xf32>
    %179 = vector.broadcast %29 : f32 to vector<8x128xf32>
    %180 = arith.mulf %179, %178 : vector<8x128xf32>
    %181 = arith.addf %165, %180 : vector<8x128xf32>
    %182 = arith.mulf %45, %59 : vector<8x128xf32>
    %183 = vector.broadcast %30 : f32 to vector<8x128xf32>
    %184 = arith.mulf %183, %182 : vector<8x128xf32>
    %185 = arith.addf %169, %184 : vector<8x128xf32>
    %186 = arith.mulf %48, %67 : vector<8x128xf32>
    %187 = vector.broadcast %32 : f32 to vector<8x128xf32>
    %188 = arith.mulf %187, %186 : vector<8x128xf32>
    %189 = arith.addf %172, %188 : vector<8x128xf32>
    %190 = arith.mulf %48, %56 : vector<8x128xf32>
    %191 = vector.broadcast %33 : f32 to vector<8x128xf32>
    %192 = arith.mulf %191, %190 : vector<8x128xf32>
    %193 = arith.addf %176, %192 : vector<8x128xf32>
    %194 = vector.broadcast %34 : f32 to vector<8x128xf32>
    %195 = arith.mulf %194, %52 : vector<8x128xf32>
    %196 = arith.addf %181, %195 : vector<8x128xf32>
    %197 = arith.addf %185, %189 : vector<8x128xf32>
    %198 = arith.addf %197, %193 : vector<8x128xf32>
    %199 = arith.addf %198, %196 : vector<8x128xf32>
    %200 = arith.subf %199, %41 : vector<8x128xf32>
    %201 = math.absf %200 : vector<8x128xf32>
    %c8_i32 = arith.constant 8 : i32
    %202 = arith.muli %arg0, %c8_i32 : i32
    %c0_i32 = arith.constant 0 : i32
    %203 = arith.addi %202, %c0_i32 : i32
    %204 = tpu.iota {dimensions = array<i32: 0>} : vector<8x128xi32>
    %205 = vector.broadcast %203 : i32 to vector<8x128xi32>
    %206 = arith.addi %205, %204 : vector<8x128xi32>
    %c128_i32 = arith.constant 128 : i32
    %207 = vector.broadcast %c128_i32 : i32 to vector<8x128xi32>
    %208 = arith.muli %206, %207 : vector<8x128xi32>
    %209 = tpu.iota {dimensions = array<i32: 1>} : vector<8x128xi32>
    %210 = arith.addi %208, %209 : vector<8x128xi32>
    %c512_i32 = arith.constant 512 : i32
    %211 = vector.broadcast %c512_i32 : i32 to vector<8x128xi32>
    %212 = arith.cmpi slt, %210, %211 : vector<8x128xi32>
    %cst_27 = arith.constant 0.000000e+00 : f32
    %213 = vector.broadcast %cst_27 : f32 to vector<8x128xf32>
    %214 = arith.select %212, %201, %213 : vector<8x128xi1>, vector<8x128xf32>
    %215 = arith.addf %39, %214 : vector<8x128xf32>
    %216 = vector.shape_cast %215 : vector<8x128xf32> to vector<1x8x128xf32>
    %cst_28 = arith.constant dense<0.000000e+00> : vector<1xf32>
    %217 = vector.multi_reduction <add>, %216, %cst_28 [1, 2] : vector<1x8x128xf32> to vector<1xf32>
    %218 = vector.shape_cast %217 : vector<1xf32> to vector<1x1x1xf32>
    %219 = vector.extract %218[0, 0, 0] : f32 from vector<1x1x1xf32>
    %220 = vector.broadcast %219 : f32 to vector<1x1x1xf32>
    %c0_29 = arith.constant 0 : index
    %c0_30 = arith.constant 0 : index
    %c0_31 = arith.constant 0 : index
    %221 = vector.load %arg5[%c0_29, %c0_30, %c0_31] : memref<1x1x1xf32, #tpu.memory_space<vmem>>, vector<1x1x1xf32>
    tpu.vector_store %arg5[%c0_29, %c0_30, %c0_31], %220 {strides = array<i32>} : memref<1x1x1xf32, #tpu.memory_space<vmem>>, vector<1x1x1xf32>,
    return
  }
  func.func @transform_0(%arg0: i32) -> (i32, i32, i32) {
    %c0_i32 = arith.constant 0 : i32
    %c0_i32_0 = arith.constant 0 : i32
    %c0_i32_1 = arith.constant 0 : i32
    return %c0_i32, %arg0, %c0_i32_0 : i32, i32, i32
  }
  func.func @transform_1(%arg0: i32) -> (i32, i32, i32) {
    %c0_i32 = arith.constant 0 : i32
    %c0_i32_0 = arith.constant 0 : i32
    %c0_i32_1 = arith.constant 0 : i32
    return %c0_i32, %arg0, %c0_i32_0 : i32, i32, i32
  }
  func.func @transform_2(%arg0: i32) -> i32 {
    %c0_i32 = arith.constant 0 : i32
    %c0_i32_0 = arith.constant 0 : i32
    return %c0_i32 : i32
  }
  func.func @transform_3(%arg0: i32) -> i32 {
    %c0_i32 = arith.constant 0 : i32
    %c0_i32_0 = arith.constant 0 : i32
    return %c0_i32 : i32
  }
  func.func @transform_4(%arg0: i32) -> (i32, i32, i32) {
    %c0_i32 = arith.constant 0 : i32
    %c0_i32_0 = arith.constant 0 : i32
    %c0_i32_1 = arith.constant 0 : i32
    return %arg0, %c0_i32, %c0_i32_0 : i32, i32, i32
  }
}

</mosaic_0001>

<llo_original>
// kernel: loss_fn.1
$region0: #{loss_fn.1}
  #allocation0 [shape = 'u32[]', space=smem, size = 0x4, offset = 0x4, fixed_abs, tag = 'smem constant byte address 0x4 - core index']
  #allocation1 [shape = 'u32[72,128]{1,0:T(1,128)}', space=vmem, size = 0x9000, scoped, tag = 'internal scratch']
  %s0 = inlined_call_operand.vmem [shape: f32[4,8,128], index: 0, kind: input, shape index: {}]
  %s1 = inlined_call_operand.vmem [shape: f32[1,8,128], index: 1, kind: input, shape index: {}]
  %s2 = inlined_call_operand.vmem [shape: f32[35], index: 2, kind: input, shape index: {}]
  %s3 = inlined_call_operand.vmem [shape: f32[4], index: 3, kind: input, shape index: {}]
  %s4 = inlined_call_operand.hbm [shape: f32[1,1,1], index: 4, kind: output, shape index: {}]
  %s5 = sld [smem:[#allocation0]]
  $region34: #{loss_fn.1} parent=0
    _
  %s7 = ssub.s32 1, %s5
  %s8 = scalar_select 0, %s7, %s5
  $region1: #{loss_fn.1} parent=0
    #allocation2 [shape = 'u8[512]{0}', space=smem, size = 0x200, scoped, tag = 'input window, operand 2, single buffered']
    #allocation3 [shape = 's32[1]{0}', space=sflag, size = 0x4, scoped, tag = 'scoped memory for loss_fn.1']
    #allocation4 [shape = 's32[1]{0}', space=sflag, size = 0x4, scoped, tag = 'scoped memory for loss_fn.1']
    #allocation5 [shape = 'u8[512]{0}', space=smem, size = 0x200, scoped, tag = 'input window, operand 3, single buffered']
    #allocation6 [shape = 's32[1]{0}', space=sflag, size = 0x4, scoped, tag = 'scoped memory for loss_fn.1']
    #allocation7 [shape = 'u8[512]{0}', space=vmem, size = 0x400, scoped, tag = 'output window, operand 0, single buffered']
    %9 = vsyncpa [#allocation4], 0
    %10 = vsyncpa [#allocation6], 0
    %11 = vsyncpa [#allocation3], 0
    // Predicated region
    $region2: #{loss_fn.1} parent=1 // pred_check
      _
    $region3: #{loss_fn.1} parent=1 // pred_check_branch
      %13 = sbr.rel (0) target = $region5
    $region4: #{loss_fn.1} parent=1 // pred_region
      _
    $region5: #{loss_fn.1} parent=1 // pred_fallthru
      _
    // Predicated region
    $region6: #{loss_fn.1} parent=1 // pred_check
      _
    $region7: #{loss_fn.1} parent=1 // pred_check_branch
      %15 = sbr.rel (0) target = $region9
    $region8: #{loss_fn.1} parent=1 // pred_region
      _
    $region9: #{loss_fn.1} parent=1 // pred_fallthru
      _
    // Predicated region
    $region10: #{loss_fn.1} parent=1 // pred_check
      _
    $region11: #{loss_fn.1} parent=1 // pred_check_branch
      %17 = sbr.rel (0) target = $region13
    $region12: #{loss_fn.1} parent=1 // pred_region
      %19 = vsyncadd [#allocation4], 0
      %s21 = sshll.u32 %s2, 4
      %s22 = int_to_ptr.vmem [resolvable:$true] %s21
      %24 = dma.vmem_to_smem %s22, 16, [#allocation2], [#allocation4]
    $region13: #{loss_fn.1} parent=1 // pred_fallthru
      _
    // Predicated region
    $region14: #{loss_fn.1} parent=1 // pred_check
      _
    $region15: #{loss_fn.1} parent=1 // pred_check_branch
      %26 = sbr.rel (0) target = $region17
    $region16: #{loss_fn.1} parent=1 // pred_region
      %28 = vsyncadd [#allocation6], 0
      %s30 = sshll.u32 %s3, 4
      %s31 = int_to_ptr.vmem [resolvable:$true] %s30
      %33 = dma.vmem_to_smem %s31, 16, [#allocation5], [#allocation6]
    $region17: #{loss_fn.1} parent=1 // pred_fallthru
      _
    // Predicated region
    $region18: #{loss_fn.1} parent=1 // pred_check
      _
    $region19: #{loss_fn.1} parent=1 // pred_check_branch
      %35 = sbr.rel (0) target = $region21
    $region20: #{loss_fn.1} parent=1 // pred_region
      %37 = dma.done [#allocation4], 16
    $region21: #{loss_fn.1} parent=1 // pred_fallthru
      _
    // Predicated region
    $region22: #{loss_fn.1} parent=1 // pred_check
      _
    $region23: #{loss_fn.1} parent=1 // pred_check_branch
      %39 = sbr.rel (0) target = $region25
    $region24: #{loss_fn.1} parent=1 // pred_region
      %41 = dma.done [#allocation6], 16
    $region25: #{loss_fn.1} parent=1 // pred_fallthru
      _
    %42 = sfence
    %s43 = sld [smem:[#allocation2]]
    %s44 = sld [smem:[#allocation2 + $0x1]]
    %s45 = sld [smem:[#allocation2 + $0x2]]
    %s46 = sld [smem:[#allocation2 + $0x3]]
    %s47 = sld [smem:[#allocation2 + $0x4]]
    %s48 = sld [smem:[#allocation2 + $0x5]]
    %s49 = sld [smem:[#allocation2 + $0x6]]
    %s50 = sld [smem:[#allocation2 + $0x7]]
    %s51 = sld [smem:[#allocation2 + $0x8]]
    %s52 = sld [smem:[#allocation2 + $0x9]]
    %s53 = sld [smem:[#allocation2 + $0xa]]
    %s54 = sld [smem:[#allocation2 + $0xb]]
    %s55 = sld [smem:[#allocation2 + $0xc]]
    %s56 = sld [smem:[#allocation2 + $0xd]]
    %s57 = sld [smem:[#allocation2 + $0xe]]
    %s58 = sld [smem:[#allocation2 + $0xf]]
    %s59 = sld [smem:[#allocation2 + $0x10]]
    %s60 = sld [smem:[#allocation2 + $0x11]]
    %s61 = sld [smem:[#allocation2 + $0x12]]
    %s62 = sld [smem:[#allocation2 + $0x13]]
    %s63 = sld [smem:[#allocation2 + $0x14]]
    %s64 = sld [smem:[#allocation2 + $0x15]]
    %s65 = sld [smem:[#allocation2 + $0x16]]
    %s66 = sld [smem:[#allocation2 + $0x17]]
    %s67 = sld [smem:[#allocation2 + $0x18]]
    %s68 = sld [smem:[#allocation2 + $0x19]]
    %s69 = sld [smem:[#allocation2 + $0x1a]]
    %s70 = sld [smem:[#allocation2 + $0x1b]]
    %s71 = sld [smem:[#allocation2 + $0x1c]]
    %s72 = sld [smem:[#allocation2 + $0x1d]]
    %s73 = sld [smem:[#allocation2 + $0x1e]]
    %s74 = sld [smem:[#allocation2 + $0x1f]]
    %s75 = sld [smem:[#allocation2 + $0x20]]
    %s76 = sld [smem:[#allocation2 + $0x21]]
    %s77 = sld [smem:[#allocation2 + $0x22]]
    %s78 = sld [smem:[#allocation5]]
    %s79 = sld [smem:[#allocation5 + $0x1]]
    %s80 = sld [smem:[#allocation5 + $0x2]]
    %s81 = sld [smem:[#allocation5 + $0x3]]
    %v82 = vld [vmem:[%s1] sm:$0xff]
    %v83 = vld [vmem:[%s0] sm:$0xff]
    %v84 = vstv %s78
    %v85 = vsub.f32 %v83, %v84
    %v86 = vmul.f32 %v85, %v85
    %v87 = vsub.f32 %v86, 1.0
    %v88 = vmul.f32 %v85, %v87
    %v89 = vmul.f32 %v85, 2.0
    %v90 = vsub.f32 %v88, %v89
    %s91 = scalar_lea.vmem %s0, 8
    %v92 = vld [vmem:[%s91] sm:$0xff]
    %v93 = vstv %s79
    %v94 = vsub.f32 %v92, %v93
    %v95 = vmul.f32 %v94, %v94
    %v96 = vsub.f32 %v95, 1.0
    %v97 = vmul.f32 %v94, %v96
    %v98 = vmul.f32 %v94, 2.0
    %v99 = vsub.f32 %v97, %v98
    %s100 = scalar_lea.vmem %s0, 16
    %v101 = vld [vmem:[%s100] sm:$0xff]
    %v102 = vstv %s80
    %v103 = vsub.f32 %v101, %v102
    %v104 = vmul.f32 %v103, %v103
    %v105 = vsub.f32 %v104, 1.0
    %v106 = vmul.f32 %v103, %v105
    %v107 = vmul.f32 %v103, 2.0
    %v108 = vsub.f32 %v106, %v107
    %s109 = scalar_lea.vmem %s0, 24
    %v110 = vld [vmem:[%s109] sm:$0xff]
    %v111 = vstv %s81
    %v112 = vsub.f32 %v110, %v111
    %v113 = vmul.f32 %v112, %v112
    %v114 = vsub.f32 %v113, 1.0
    %v115 = vmul.f32 %v112, %v114
    %v116 = vmul.f32 %v112, 2.0
    %v117 = vsub.f32 %v115, %v116
    %v118 = vstv %s44
    %v119 = vmul.f32 %v118, %v112
    %v120 = vstv %s48
    %v121 = vmul.f32 %v120, %v114
    %v122 = vadd.f32 %v119, %v121
    %v123 = vstv %s58
    %v124 = vmul.f32 %v123, %v117
    %v125 = vadd.f32 %v122, %v124
    %v126 = vstv %s43
    %v127 = vadd.f32 %v125, %v126
    %v128 = vstv %s49
    %v129 = vmul.f32 %v128, %v112
    %v130 = vstv %s59
    %v131 = vmul.f32 %v130, %v114
    %v132 = vadd.f32 %v129, %v131
    %v133 = vstv %s45
    %v134 = vadd.f32 %v132, %v133
    %v135 = vmul.f32 %v103, %v134
    %v136 = vstv %s51
    %v137 = vmul.f32 %v136, %v112
    %v138 = vstv %s62
    %v139 = vmul.f32 %v138, %v114
    %v140 = vadd.f32 %v137, %v139
    %v141 = vstv %s46
    %v142 = vadd.f32 %v140, %v141
    %v143 = vmul.f32 %v94, %v142
    %v144 = vstv %s54
    %v145 = vmul.f32 %v144, %v112
    %v146 = vstv %s68
    %v147 = vmul.f32 %v146, %v114
    %v148 = vadd.f32 %v145, %v147
    %v149 = vstv %s47
    %v150 = vadd.f32 %v148, %v149
    %v151 = vmul.f32 %v85, %v150
    %v152 = vstv %s60
    %v153 = vmul.f32 %v152, %v112
    %v154 = vstv %s50
    %v155 = vadd.f32 %v153, %v154
    %v156 = vmul.f32 %v105, %v155
    %v157 = vadd.f32 %v127, %v156
    %v158 = vmul.f32 %v94, %v103
    %v159 = vstv %s63
    %v160 = vmul.f32 %v159, %v112
    %v161 = vstv %s52
    %v162 = vadd.f32 %v160, %v161
    %v163 = vmul.f32 %v158, %v162
    %v164 = vadd.f32 %v135, %v163
    %v165 = vstv %s65
    %v166 = vmul.f32 %v165, %v112
    %v167 = vstv %s53
    %v168 = vadd.f32 %v166, %v167
    %v169 = vmul.f32 %v96, %v168
    %v170 = vadd.f32 %v143, %v169
    %v171 = vmul.f32 %v85, %v103
    %v172 = vstv %s69
    %v173 = vmul.f32 %v172, %v112
    %v174 = vstv %s55
    %v175 = vadd.f32 %v173, %v174
    %v176 = vmul.f32 %v171, %v175
    %v177 = vadd.f32 %v151, %v176
    %v178 = vmul.f32 %v85, %v94
    %v179 = vstv %s71
    %v180 = vmul.f32 %v179, %v112
    %v181 = vstv %s56
    %v182 = vadd.f32 %v180, %v181
    %v183 = vmul.f32 %v178, %v182
    %v184 = vadd.f32 %v157, %v183
    %v185 = vstv %s74
    %v186 = vmul.f32 %v185, %v112
    %v187 = vstv %s57
    %v188 = vadd.f32 %v186, %v187
    %v189 = vmul.f32 %v87, %v188
    %v190 = vadd.f32 %v164, %v189
    %v191 = vstv %s61
    %v192 = vmul.f32 %v191, %v108
    %v193 = vadd.f32 %v170, %v192
    %v194 = vmul.f32 %v94, %v105
    %v195 = vstv %s64
    %v196 = vmul.f32 %v195, %v194
    %v197 = vadd.f32 %v177, %v196
    %v198 = vmul.f32 %v96, %v103
    %v199 = vstv %s66
    %v200 = vmul.f32 %v199, %v198
    %v201 = vadd.f32 %v184, %v200
    %v202 = vstv %s67
    %v203 = vmul.f32 %v202, %v99
    %v204 = vadd.f32 %v190, %v203
    %v205 = vmul.f32 %v85, %v105
    %v206 = vstv %s70
    %v207 = vmul.f32 %v206, %v205
    %v208 = vadd.f32 %v193, %v207
    %v209 = vmul.f32 %v178, %v103
    %v210 = vstv %s72
    %v211 = vmul.f32 %v210, %v209
    %v212 = vadd.f32 %v197, %v211
    %v213 = vmul.f32 %v85, %v96
    %v214 = vstv %s73
    %v215 = vmul.f32 %v214, %v213
    %v216 = vadd.f32 %v201, %v215
    %v217 = vmul.f32 %v87, %v103
    %v218 = vstv %s75
    %v219 = vmul.f32 %v218, %v217
    %v220 = vadd.f32 %v204, %v219
    %v221 = vmul.f32 %v87, %v94
    %v222 = vstv %s76
    %v223 = vmul.f32 %v222, %v221
    %v224 = vadd.f32 %v208, %v223
    %v225 = vstv %s77
    %v226 = vmul.f32 %v225, %v90
    %v227 = vadd.f32 %v212, %v226
    %v228 = vadd.f32 %v216, %v220
    %v229 = vadd.f32 %v228, %v224
    %v230 = vadd.f32 %v229, %v227
    %v231 = vsub.f32 %v230, %v82
    %v232 = vand.u32 2147483647, %v231
    %s233 = smul.u32 0, 8
    %v234 = vlaneseq
    %v235 = vshrl.u32 %v234, 7
    %v236 = vstv %s233
    %v237 = vadd.s32 %v236, %v235
    %v238 = vmul.u32 %v237, 128
    %v239 = vlaneseq
    %v240 = vand.u32 %v239, 127
    %v241 = vadd.s32 %v238, %v240
    %vm242 = vcmp.lt.s32.totalorder %v241, 512
    %v243 = vsel %vm242, %v232, 0.0
    %v244 = vadd.f32 %v243, 0.0
    %245 = vadd.xlane.f32.xlu0 %v244
    %v246 = vpop.xlane.xlu0 %245
    %v247 = vrot.slane %v246, 4
    %v248 = vadd.f32 %v246, %v247
    %v249 = vrot.slane %v248, 2
    %v250 = vadd.f32 %v248, %v249
    %v251 = vrot.slane %v250, 1
    %v252 = vadd.f32 %v250, %v251
    %s253 = vtos %v252
    %v254 = vstv %s253
    %vm255 = vcmask 0
    %256 = vst.msk [vmem:[#allocation7] sm:$0x1] %vm255, %v254
    // Predicated region
    $region26: #{loss_fn.1} parent=1 // pred_check
      _
    $region27: #{loss_fn.1} parent=1 // pred_check_branch
      %258 = sbr.rel (0) target = $region29
    $region28: #{loss_fn.1} parent=1 // pred_region
      %260 = vsyncadd [#allocation3], 0
      %s262 = sshll.u32 [#allocation7], 4
      %s263 = int_to_ptr.vmem [resolvable:$true] %s262
      %s264 = sshll.u32 %s4, 4
      %s265 = int_to_ptr.hbm [resolvable:$true] %s264
      %267 = dma.vmem_to_hbm [thread:$0]  %s263, 16, %s265, [#allocation3]
    $region29: #{loss_fn.1} parent=1 // pred_fallthru
      _
    // Predicated region
    $region30: #{loss_fn.1} parent=1 // pred_check
      _
    $region31: #{loss_fn.1} parent=1 // pred_check_branch
      %269 = sbr.rel (0) target = $region33
    $region32: #{loss_fn.1} parent=1 // pred_region
      %271 = dma.done [#allocation3], 16
    $region33: #{loss_fn.1} parent=1 // pred_fallthru
      _
    %272 = vsyncpa [#allocation3], 1
    %273 = vsyncpa [#allocation4], 1
    %274 = vsyncpa [#allocation6], 1

</llo_original>
